<compile_context>
chip_gen: v5e
topology: v5e:2x2
jax: 0.10.0
libtpu: 0.0.40
codegen_flags: <defaults>
</compile_context>

<pallas_src>
import functools

import jax
import jax.numpy as jnp
import numpy as np
from jax import lax
from jax.experimental import pallas as pl
from jax.experimental.pallas import tpu as pltpu


def _partial_sums(x, *, h, w, use_roll):
    """Sums of squared forward diffs along H and W for a block of planes.

    x: (bc, h, w) float32.  Differences are always taken inside a plane
    (never across the plane axis), matching the NCHW reference.
    """
    if use_roll:
        # Shifted copies via the XLU rotate instead of misaligned +/-1 slice
        # pairs; everything stays full-shape and lane-aligned for the VPU.
        dh = pltpu.roll(x, shift=1, axis=1) - x
        dw = pltpu.roll(x, shift=1, axis=2) - x
        # The cyclic roll adds exactly one wrap diff per plane per axis,
        # +/-(row0 - row_{h-1}) resp. +/-(col0 - col_{w-1}).  Its square is
        # independent of the rotate direction, so subtracting it afterwards
        # is robust to the roll convention and needs no per-element mask.
        wrap_h = x[:, 0:1, :] - x[:, h - 1:h, :]
        wrap_w = x[:, :, 0:1] - x[:, :, w - 1:w]
        h_sum = jnp.sum(dh * dh) - jnp.sum(wrap_h * wrap_h)
        w_sum = jnp.sum(dw * dw) - jnp.sum(wrap_w * wrap_w)
    else:
        # Fallback for plane shapes where the rotate is not natively tiled.
        dh = x[:, 1:, :] - x[:, :-1, :]
        dw = x[:, :, 1:] - x[:, :, :-1]
        h_sum = jnp.sum(dh * dh)
        w_sum = jnp.sum(dw * dw)
    return h_sum, w_sum


def _tv_kernel(x_ref, hout_ref, wout_ref, *, h, w, block_planes,
               total_planes, use_roll):
    """Per-block partial sums of squared h/w forward differences."""

    def emit(x):
        h_sum, w_sum = _partial_sums(x, h=h, w=w, use_roll=use_roll)
        # Full lane-dense (1, 8, 128) broadcast stores (unmasked vst); the
        # wrapper reads element [0, 0] of each block.
        hout_ref[...] = jnp.full((1, 8, 128), h_sum, jnp.float32)
        wout_ref[...] = jnp.full((1, 8, 128), w_sum, jnp.float32)

    rem = total_planes % block_planes
    if rem == 0:
        # No partial block anywhere: zero masking cost on every step.
        emit(x_ref[...].astype(jnp.float32))
    else:
        i = pl.program_id(0)
        last = pl.num_programs(0) - 1

        @pl.when(i != last)
        def _():
            emit(x_ref[...].astype(jnp.float32))

        @pl.when(i == last)
        def _():
            x = x_ref[...].astype(jnp.float32)
            # Planes >= rem in the last block are Pallas OOB padding with
            # unspecified contents; zero them so they contribute nothing
            # (diffs never cross the plane axis, so valid planes are safe).
            valid = lax.broadcasted_iota(jnp.int32, x.shape, 0) < rem
            emit(jnp.where(valid, x, 0.0))


def tv_loss(x, tv_loss_weight: float = 1.0, *, block_planes=None):
    """Pallas TV loss on an NCHW array.  Requires h >= 2 and w >= 2."""
    n, c, h, w = x.shape
    if h < 2 or w < 2:
        raise ValueError("TV loss requires h >= 2 and w >= 2 "
                         "(count_h / count_w would be zero).")
    count_h = c * (h - 1) * w
    count_w = c * h * (w - 1)
    # result = weight * 2 * (h_tv / count_h + w_tv / count_w) / batch
    scale_h = float(tv_loss_weight) * 2.0 / (count_h * n)
    scale_w = float(tv_loss_weight) * 2.0 / (count_w * n)

    total_planes = n * c
    x_flat = x.reshape(total_planes, h, w)

    plane_bytes = h * w * x.dtype.itemsize
    if block_planes is None:
        # ~4 MiB blocks: DMA time dominates per-step overhead on v6e/v7x and
        # is still comfortable for v5e VMEM.
        target_bytes = 4 << 20
        bc = int(max(1, min(total_planes, target_bytes // max(plane_bytes, 1))))
        # Prefer a divisor of total_planes so no remainder mask is needed.
        for cand in range(bc, max(bc // 2, 1) - 1, -1):
            if total_planes % cand == 0:
                bc = cand
                break
    else:
        bc = int(max(1, min(int(block_planes), total_planes)))
    num_blocks = int(pl.cdiv(total_planes, bc))
    block_bytes = bc * plane_bytes
    # TODO(synk): for planes larger than the block target (bc == 1, e.g.
    # 2048x4096 f32) a single plane per step can still exceed v7x's 64 MiB
    # VMEM; H-tiling with a 1-row halo would be needed to bound VMEM there.
    vmem_limit = int(min(100 << 20, max(32 << 20, 2 * block_bytes + (2 << 20))))

    # XLU rotate fast path only for natively tiled planes.
    use_roll = (h % 8 == 0) and (w % 128 == 0)

    kernel = functools.partial(
        _tv_kernel, h=h, w=w, block_planes=bc, total_planes=total_planes,
        use_roll=use_roll)

    h_parts, w_parts = pl.pallas_call(
        kernel,
        out_shape=(jax.ShapeDtypeStruct((num_blocks, 8, 128), jnp.float32),
                   jax.ShapeDtypeStruct((num_blocks, 8, 128), jnp.float32)),
        grid_spec=pltpu.PrefetchScalarGridSpec(
            num_scalar_prefetch=0,
            grid=(num_blocks,),
            in_specs=[pl.BlockSpec((bc, h, w), lambda i: (i, 0, 0))],
            out_specs=(pl.BlockSpec((1, 8, 128), lambda i: (i, 0, 0)),
                       pl.BlockSpec((1, 8, 128), lambda i: (i, 0, 0))),
        ),
        compiler_params=pltpu.CompilerParams(
            dimension_semantics=("parallel",),      # blocks are independent
            vmem_limit_bytes=vmem_limit),
        cost_estimate=pl.CostEstimate(
            flops=8 * n * c * h * w,
            transcendentals=0,
            bytes_accessed=int(x.size) * x.dtype.itemsize
            + 2 * num_blocks * 8 * 128 * 4),
    )(x_flat)

    h_tv = jnp.sum(h_parts[:, 0, 0])
    w_tv = jnp.sum(w_parts[:, 0, 0])
    return scale_h * h_tv + scale_w * w_tv


def tv_loss_ref(x, tv_loss_weight: float = 1.0):
    """Pure-JAX reference matching the PyTorch module."""
    n, c, h, w = x.shape
    count_h = c * (h - 1) * w
    count_w = c * h * (w - 1)
    xf = x.astype(jnp.float32)
    h_tv = jnp.sum((xf[:, :, 1:, :] - xf[:, :, :-1, :]) ** 2)
    w_tv = jnp.sum((xf[:, :, :, 1:] - xf[:, :, :, :-1]) ** 2)
    return tv_loss_weight * 2.0 * (h_tv / count_h + w_tv / count_w) / n


def _check(x, **kwargs):
    out = jax.block_until_ready(tv_loss(x, tv_loss_weight=1.0, **kwargs))
    ref = jax.block_until_ready(tv_loss_ref(x, tv_loss_weight=1.0))
    assert np.allclose(np.asarray(out), np.asarray(ref),
                       rtol=1e-4, atol=1e-5), (np.asarray(out), np.asarray(ref))


if __name__ == "__main__":
    key = jax.random.PRNGKey(0)
    k1, k2, k3 = jax.random.split(key, 3)
    # Lane/sublane-aligned planes -> pltpu.roll fast path.
    _check(jax.random.normal(k1, (2, 4, 16, 128), dtype=jnp.float32))
    # Unaligned planes -> slice-based fallback path.
    _check(jax.random.normal(k2, (2, 4, 16, 16), dtype=jnp.float32))
    # Forced non-divisor block count -> pl.when-gated remainder mask path.
    _check(jax.random.normal(k3, (2, 3, 16, 128), dtype=jnp.float32),
           block_planes=4)
    print("KERNEL_OK")
</pallas_src>

<mosaic_0001>
module attributes {stable_mosaic.version = 11 : i64} {
  func.func @_tv_kernel(%arg0: i32, %arg1: memref<8x16x128xf32, #tpu.memory_space<vmem>>, %arg2: memref<1x8x128xf32, #tpu.memory_space<vmem>>, %arg3: memref<1x8x128xf32, #tpu.memory_space<vmem>>) attributes {dimension_semantics = [#tpu.dimension_semantics<parallel>], iteration_bounds = array<i64: 1>, scalar_prefetch = 0 : i64, scratch_operands = 0 : i64, tpu.core_type = #tpu.core_type<tc>, window_params = [{transform_indices = @transform_0, window_bounds = array<i64: 8, 16, 128>}, {transform_indices = @transform_1, window_bounds = array<i64: 1, 8, 128>}, {transform_indices = @transform_2, window_bounds = array<i64: 1, 8, 128>}]} {
    %c0 = arith.constant 0 : index
    %c0_0 = arith.constant 0 : index
    %c0_1 = arith.constant 0 : index
    %0 = vector.load %arg1[%c0, %c0_0, %c0_1] : memref<8x16x128xf32, #tpu.memory_space<vmem>>, vector<8x16x128xf32>
    %c1_i32 = arith.constant 1 : i32
    %1 = tpu.dynamic_rotate %0 by %c1_i32 dim 1 : vector<8x16x128xf32>, i32 -> vector<8x16x128xf32>
    %2 = arith.subf %1, %0 : vector<8x16x128xf32>
    %c1_i32_2 = arith.constant 1 : i32
    %3 = tpu.dynamic_rotate %0 by %c1_i32_2 dim 2 : vector<8x16x128xf32>, i32 -> vector<8x16x128xf32>
    %4 = arith.subf %3, %0 : vector<8x16x128xf32>
    %5 = vector.extract_strided_slice %0 {offsets = [0, 0, 0], sizes = [8, 1, 128], strides = [1, 1, 1]} : vector<8x16x128xf32> to vector<8x1x128xf32>
    %6 = vector.extract_strided_slice %0 {offsets = [0, 15, 0], sizes = [8, 1, 128], strides = [1, 1, 1]} : vector<8x16x128xf32> to vector<8x1x128xf32>
    %7 = arith.subf %5, %6 : vector<8x1x128xf32>
    %8 = vector.extract_strided_slice %0 {offsets = [0, 0, 0], sizes = [8, 16, 1], strides = [1, 1, 1]} : vector<8x16x128xf32> to vector<8x16x1xf32>
    %9 = vector.extract_strided_slice %0 {offsets = [0, 0, 127], sizes = [8, 16, 1], strides = [1, 1, 1]} : vector<8x16x128xf32> to vector<8x16x1xf32>
    %10 = arith.subf %8, %9 : vector<8x16x1xf32>
    %11 = arith.mulf %2, %2 : vector<8x16x128xf32>
    %12 = vector.shape_cast %11 : vector<8x16x128xf32> to vector<1x8x16x128xf32>
    %cst = arith.constant dense<0.000000e+00> : vector<1xf32>
    %13 = vector.multi_reduction <add>, %12, %cst [1, 2, 3] : vector<1x8x16x128xf32> to vector<1xf32>
    %14 = vector.shape_cast %13 : vector<1xf32> to vector<1x1x1x1xf32>
    %15 = vector.extract %14[0, 0, 0, 0] : f32 from vector<1x1x1x1xf32>
    %16 = arith.mulf %7, %7 : vector<8x1x128xf32>
    %17 = vector.shape_cast %16 : vector<8x1x128xf32> to vector<1x8x1x128xf32>
    %cst_3 = arith.constant dense<0.000000e+00> : vector<1xf32>
    %18 = vector.multi_reduction <add>, %17, %cst_3 [1, 2, 3] : vector<1x8x1x128xf32> to vector<1xf32>
    %19 = vector.shape_cast %18 : vector<1xf32> to vector<1x1x1x1xf32>
    %20 = vector.extract %19[0, 0, 0, 0] : f32 from vector<1x1x1x1xf32>
    %21 = arith.subf %15, %20 : f32
    %22 = arith.mulf %4, %4 : vector<8x16x128xf32>
    %23 = vector.shape_cast %22 : vector<8x16x128xf32> to vector<1x8x16x128xf32>
    %cst_4 = arith.constant dense<0.000000e+00> : vector<1xf32>
    %24 = vector.multi_reduction <add>, %23, %cst_4 [1, 2, 3] : vector<1x8x16x128xf32> to vector<1xf32>
    %25 = vector.shape_cast %24 : vector<1xf32> to vector<1x1x1x1xf32>
    %26 = vector.extract %25[0, 0, 0, 0] : f32 from vector<1x1x1x1xf32>
    %27 = arith.mulf %10, %10 : vector<8x16x1xf32>
    %28 = vector.shape_cast %27 : vector<8x16x1xf32> to vector<1x8x16x1xf32>
    %cst_5 = arith.constant dense<0.000000e+00> : vector<1xf32>
    %29 = vector.multi_reduction <add>, %28, %cst_5 [1, 2, 3] : vector<1x8x16x1xf32> to vector<1xf32>
    %30 = vector.shape_cast %29 : vector<1xf32> to vector<1x1x1x1xf32>
    %31 = vector.extract %30[0, 0, 0, 0] : f32 from vector<1x1x1x1xf32>
    %32 = arith.subf %26, %31 : f32
    %33 = vector.broadcast %21 : f32 to vector<1x8x128xf32>
    %c0_6 = arith.constant 0 : index
    %c0_7 = arith.constant 0 : index
    %c0_8 = arith.constant 0 : index
    %34 = vector.load %arg2[%c0_6, %c0_7, %c0_8] : memref<1x8x128xf32, #tpu.memory_space<vmem>>, vector<1x8x128xf32>
    tpu.vector_store %arg2[%c0_6, %c0_7, %c0_8], %33 {strides = array<i32>} : memref<1x8x128xf32, #tpu.memory_space<vmem>>, vector<1x8x128xf32>,
    %35 = vector.broadcast %32 : f32 to vector<1x8x128xf32>
    %c0_9 = arith.constant 0 : index
    %c0_10 = arith.constant 0 : index
    %c0_11 = arith.constant 0 : index
    %36 = vector.load %arg3[%c0_9, %c0_10, %c0_11] : memref<1x8x128xf32, #tpu.memory_space<vmem>>, vector<1x8x128xf32>
    tpu.vector_store %arg3[%c0_9, %c0_10, %c0_11], %35 {strides = array<i32>} : memref<1x8x128xf32, #tpu.memory_space<vmem>>, vector<1x8x128xf32>,
    return
  }
  func.func @transform_0(%arg0: i32) -> (i32, i32, i32) {
    %c0_i32 = arith.constant 0 : i32
    %c0_i32_0 = arith.constant 0 : i32
    %c0_i32_1 = arith.constant 0 : i32
    return %arg0, %c0_i32, %c0_i32_0 : i32, i32, i32
  }
  func.func @transform_1(%arg0: i32) -> (i32, i32, i32) {
    %c0_i32 = arith.constant 0 : i32
    %c0_i32_0 = arith.constant 0 : i32
    %c0_i32_1 = arith.constant 0 : i32
    return %arg0, %c0_i32, %c0_i32_0 : i32, i32, i32
  }
  func.func @transform_2(%arg0: i32) -> (i32, i32, i32) {
    %c0_i32 = arith.constant 0 : i32
    %c0_i32_0 = arith.constant 0 : i32
    %c0_i32_1 = arith.constant 0 : i32
    return %arg0, %c0_i32, %c0_i32_0 : i32, i32, i32
  }
}

</mosaic_0001>

<llo_original>
// kernel: tpu_custom_call.1
$region0: #{tpu_custom_call.1}
  #allocation0 [shape = 'u32[]', space=smem, size = 0x4, offset = 0x4, fixed_abs, tag = 'smem constant byte address 0x4 - core index']
  #allocation1 [shape = 'u32[72,128]{1,0:T(1,128)}', space=vmem, size = 0x9000, scoped, tag = 'internal scratch']
  %s0 = inlined_call_operand.hbm [shape: f32[8,16,128], index: 0, kind: input, shape index: {}]
  %s1 = inlined_call_operand.hbm [shape: f32[1,8,128], index: 1, kind: output, shape index: {0}]
  %s2 = inlined_call_operand.hbm [shape: f32[1,8,128], index: 2, kind: output, shape index: {1}]
  %3 = xla_tuple %s1, %s2
  %s4 = sld [smem:[#allocation0]]
  $region26: #{tpu_custom_call.1} parent=0
    _
  %s6 = ssub.s32 1, %s4
  %s7 = scalar_select 0, %s6, %s4
  $region1: #{tpu_custom_call.1} parent=0
    #allocation2 [shape = 'u8[65536]{0}', space=vmem, size = 0x10000, scoped, tag = 'input window, operand 0, single buffered']
    #allocation3 [shape = 's32[1]{0}', space=sflag, size = 0x4, scoped, tag = 'scoped memory for tpu_custom_call.1']
    #allocation4 [shape = 's32[1]{0}', space=sflag, size = 0x4, scoped, tag = 'scoped memory for tpu_custom_call.1']
    #allocation5 [shape = 'u8[4096]{0}', space=vmem, size = 0x1000, scoped, tag = 'output window, operand 0, single buffered']
    #allocation6 [shape = 'u8[4096]{0}', space=vmem, size = 0x1000, scoped, tag = 'output window, operand 1, single buffered']
    #allocation7 [shape = 's32[1]{0}', space=sflag, size = 0x4, scoped, tag = 'scoped memory for tpu_custom_call.1']
    %8 = vsyncpa [#allocation3], 0
    %9 = vsyncpa [#allocation4], 0
    %10 = vsyncpa [#allocation7], 0
    // Predicated region
    $region2: #{tpu_custom_call.1} parent=1 // pred_check
      _
    $region3: #{tpu_custom_call.1} parent=1 // pred_check_branch
      %12 = sbr.rel (0) target = $region5
    $region4: #{tpu_custom_call.1} parent=1 // pred_region
      %14 = vsyncadd [#allocation3], 0
      %s15 = sshll.u32 %s0, 4
      %s16 = int_to_ptr.hbm [resolvable:$true] %s15
      %s17 = sshll.u32 [#allocation2], 4
      %s18 = int_to_ptr.vmem [resolvable:$true] %s17
      %23 = dma.hbm_to_vmem [thread:$0]  %s16, 2048, %s18, [#allocation3], 128, 128, 8
    $region5: #{tpu_custom_call.1} parent=1 // pred_fallthru
      _
    // Predicated region
    $region6: #{tpu_custom_call.1} parent=1 // pred_check
      _
    $region7: #{tpu_custom_call.1} parent=1 // pred_check_branch
      %25 = sbr.rel (0) target = $region9
    $region8: #{tpu_custom_call.1} parent=1 // pred_region
      %27 = dma.done [#allocation3], 2048
    $region9: #{tpu_custom_call.1} parent=1 // pred_fallthru
      _
    %v28 = vld [vmem:[#allocation2] sm:$0xff]
    %v29 = vld [vmem:[#allocation2 + $0x8] sm:$0xff]
    %v30 = vld [vmem:[#allocation2 + $0x10] sm:$0xff]
    %v31 = vld [vmem:[#allocation2 + $0x18] sm:$0xff]
    %v32 = vld [vmem:[#allocation2 + $0x20] sm:$0xff]
    %v33 = vld [vmem:[#allocation2 + $0x28] sm:$0xff]
    %v34 = vld [vmem:[#allocation2 + $0x30] sm:$0xff]
    %v35 = vld [vmem:[#allocation2 + $0x38] sm:$0xff]
    %v36 = vld [vmem:[#allocation2 + $0x40] sm:$0xff]
    %v37 = vld [vmem:[#allocation2 + $0x48] sm:$0xff]
    %v38 = vld [vmem:[#allocation2 + $0x50] sm:$0xff]
    %v39 = vld [vmem:[#allocation2 + $0x58] sm:$0xff]
    %v40 = vld [vmem:[#allocation2 + $0x60] sm:$0xff]
    %v41 = vld [vmem:[#allocation2 + $0x68] sm:$0xff]
    %v42 = vld [vmem:[#allocation2 + $0x70] sm:$0xff]
    %v43 = vld [vmem:[#allocation2 + $0x78] sm:$0xff]
    %v44 = vrot.slane %v28, 7
    %v45 = vrot.slane %v30, 7
    %v46 = vrot.slane %v32, 7
    %v47 = vrot.slane %v34, 7
    %v48 = vrot.slane %v36, 7
    %v49 = vrot.slane %v38, 7
    %v50 = vrot.slane %v40, 7
    %v51 = vrot.slane %v42, 7
    %v52 = vrot.slane %v29, 7
    %v53 = vrot.slane %v31, 7
    %v54 = vrot.slane %v33, 7
    %v55 = vrot.slane %v35, 7
    %v56 = vrot.slane %v37, 7
    %v57 = vrot.slane %v39, 7
    %v58 = vrot.slane %v41, 7
    %v59 = vrot.slane %v43, 7
    %v60 = vlaneseq
    %v61 = vshrl.u32 %v60, 7
    %vm62 = vcmp.lt.s32.totalorder %v61, 1
    %v63 = vsel %vm62, %v44, %v52
    %v64 = vsel %vm62, %v45, %v53
    %v65 = vsel %vm62, %v46, %v54
    %v66 = vsel %vm62, %v47, %v55
    %v67 = vsel %vm62, %v48, %v56
    %v68 = vsel %vm62, %v49, %v57
    %v69 = vsel %vm62, %v50, %v58
    %v70 = vsel %vm62, %v51, %v59
    %v71 = vsel %vm62, %v52, %v44
    %v72 = vsel %vm62, %v53, %v45
    %v73 = vsel %vm62, %v54, %v46
    %v74 = vsel %vm62, %v55, %v47
    %v75 = vsel %vm62, %v56, %v48
    %v76 = vsel %vm62, %v57, %v49
    %v77 = vsel %vm62, %v58, %v50
    %v78 = vsel %vm62, %v59, %v51
    %v79 = vsub.f32 %v71, %v28
    %v80 = vsub.f32 %v63, %v29
    %v81 = vsub.f32 %v72, %v30
    %v82 = vsub.f32 %v64, %v31
    %v83 = vsub.f32 %v73, %v32
    %v84 = vsub.f32 %v65, %v33
    %v85 = vsub.f32 %v74, %v34
    %v86 = vsub.f32 %v66, %v35
    %v87 = vsub.f32 %v75, %v36
    %v88 = vsub.f32 %v67, %v37
    %v89 = vsub.f32 %v76, %v38
    %v90 = vsub.f32 %v68, %v39
    %v91 = vsub.f32 %v77, %v40
    %v92 = vsub.f32 %v69, %v41
    %v93 = vsub.f32 %v78, %v42
    %v94 = vsub.f32 %v70, %v43
    %95 = vrot.lane.b32.xlu0 %v28, 1
    %v96 = vpop.permute.xlu0 %95
    %97 = vrot.lane.b32.xlu0 %v29, 1
    %v98 = vpop.permute.xlu0 %97
    %99 = vrot.lane.b32.xlu0 %v30, 1
    %v100 = vpop.permute.xlu0 %99
    %101 = vrot.lane.b32.xlu0 %v31, 1
    %v102 = vpop.permute.xlu0 %101
    %103 = vrot.lane.b32.xlu0 %v32, 1
    %v104 = vpop.permute.xlu0 %103
    %105 = vrot.lane.b32.xlu0 %v33, 1
    %v106 = vpop.permute.xlu0 %105
    %107 = vrot.lane.b32.xlu0 %v34, 1
    %v108 = vpop.permute.xlu0 %107
    %109 = vrot.lane.b32.xlu0 %v35, 1
    %v110 = vpop.permute.xlu0 %109
    %111 = vrot.lane.b32.xlu0 %v36, 1
    %v112 = vpop.permute.xlu0 %111
    %113 = vrot.lane.b32.xlu0 %v37, 1
    %v114 = vpop.permute.xlu0 %113
    %115 = vrot.lane.b32.xlu0 %v38, 1
    %v116 = vpop.permute.xlu0 %115
    %117 = vrot.lane.b32.xlu0 %v39, 1
    %v118 = vpop.permute.xlu0 %117
    %119 = vrot.lane.b32.xlu0 %v40, 1
    %v120 = vpop.permute.xlu0 %119
    %121 = vrot.lane.b32.xlu0 %v41, 1
    %v122 = vpop.permute.xlu0 %121
    %123 = vrot.lane.b32.xlu0 %v42, 1
    %v124 = vpop.permute.xlu0 %123
    %125 = vrot.lane.b32.xlu0 %v43, 1
    %v126 = vpop.permute.xlu0 %125
    %v127 = vsub.f32 %v96, %v28
    %v128 = vsub.f32 %v98, %v29
    %v129 = vsub.f32 %v100, %v30
    %v130 = vsub.f32 %v102, %v31
    %v131 = vsub.f32 %v104, %v32
    %v132 = vsub.f32 %v106, %v33
    %v133 = vsub.f32 %v108, %v34
    %v134 = vsub.f32 %v110, %v35
    %v135 = vsub.f32 %v112, %v36
    %v136 = vsub.f32 %v114, %v37
    %v137 = vsub.f32 %v116, %v38
    %v138 = vsub.f32 %v118, %v39
    %v139 = vsub.f32 %v120, %v40
    %v140 = vsub.f32 %v122, %v41
    %v141 = vsub.f32 %v124, %v42
    %v142 = vsub.f32 %v126, %v43
    %v151 = vrot.slane %v29, 7
    %v152 = vrot.slane %v31, 7
    %v153 = vrot.slane %v33, 7
    %v154 = vrot.slane %v35, 7
    %v155 = vrot.slane %v37, 7
    %v156 = vrot.slane %v39, 7
    %v157 = vrot.slane %v41, 7
    %v158 = vrot.slane %v43, 7
    %v167 = vsub.f32 %v28, %v151
    %v168 = vsub.f32 %v30, %v152
    %v169 = vsub.f32 %v32, %v153
    %v170 = vsub.f32 %v34, %v154
    %v171 = vsub.f32 %v36, %v155
    %v172 = vsub.f32 %v38, %v156
    %v173 = vsub.f32 %v40, %v157
    %v174 = vsub.f32 %v42, %v158
    %183 = vrot.lane.b32.xlu0 %v28, 1
    %v184 = vpop.permute.xlu0 %183
    %185 = vrot.lane.b32.xlu0 %v29, 1
    %v186 = vpop.permute.xlu0 %185
    %187 = vrot.lane.b32.xlu0 %v30, 1
    %v188 = vpop.permute.xlu0 %187
    %189 = vrot.lane.b32.xlu0 %v31, 1
    %v190 = vpop.permute.xlu0 %189
    %191 = vrot.lane.b32.xlu0 %v32, 1
    %v192 = vpop.permute.xlu0 %191
    %193 = vrot.lane.b32.xlu0 %v33, 1
    %v194 = vpop.permute.xlu0 %193
    %195 = vrot.lane.b32.xlu0 %v34, 1
    %v196 = vpop.permute.xlu0 %195
    %197 = vrot.lane.b32.xlu0 %v35, 1
    %v198 = vpop.permute.xlu0 %197
    %199 = vrot.lane.b32.xlu0 %v36, 1
    %v200 = vpop.permute.xlu0 %199
    %201 = vrot.lane.b32.xlu0 %v37, 1
    %v202 = vpop.permute.xlu0 %201
    %203 = vrot.lane.b32.xlu0 %v38, 1
    %v204 = vpop.permute.xlu0 %203
    %205 = vrot.lane.b32.xlu0 %v39, 1
    %v206 = vpop.permute.xlu0 %205
    %207 = vrot.lane.b32.xlu0 %v40, 1
    %v208 = vpop.permute.xlu0 %207
    %209 = vrot.lane.b32.xlu0 %v41, 1
    %v210 = vpop.permute.xlu0 %209
    %211 = vrot.lane.b32.xlu0 %v42, 1
    %v212 = vpop.permute.xlu0 %211
    %213 = vrot.lane.b32.xlu0 %v43, 1
    %v214 = vpop.permute.xlu0 %213
    %v231 = vsub.f32 %v28, %v184
    %v232 = vsub.f32 %v29, %v186
    %v233 = vsub.f32 %v30, %v188
    %v234 = vsub.f32 %v31, %v190
    %v235 = vsub.f32 %v32, %v192
    %v236 = vsub.f32 %v33, %v194
    %v237 = vsub.f32 %v34, %v196
    %v238 = vsub.f32 %v35, %v198
    %v239 = vsub.f32 %v36, %v200
    %v240 = vsub.f32 %v37, %v202
    %v241 = vsub.f32 %v38, %v204
    %v242 = vsub.f32 %v39, %v206
    %v243 = vsub.f32 %v40, %v208
    %v244 = vsub.f32 %v41, %v210
    %v245 = vsub.f32 %v42, %v212
    %v246 = vsub.f32 %v43, %v214
    %v247 = vmul.f32 %v79, %v79
    %v248 = vmul.f32 %v80, %v80
    %v249 = vmul.f32 %v81, %v81
    %v250 = vmul.f32 %v82, %v82
    %v251 = vmul.f32 %v83, %v83
    %v252 = vmul.f32 %v84, %v84
    %v253 = vmul.f32 %v85, %v85
    %v254 = vmul.f32 %v86, %v86
    %v255 = vmul.f32 %v87, %v87
    %v256 = vmul.f32 %v88, %v88
    %v257 = vmul.f32 %v89, %v89
    %v258 = vmul.f32 %v90, %v90
    %v259 = vmul.f32 %v91, %v91
    %v260 = vmul.f32 %v92, %v92
    %v261 = vmul.f32 %v93, %v93
    %v262 = vmul.f32 %v94, %v94
    %v263 = vadd.f32 %v247, %v248
    %v264 = vadd.f32 %v263, %v249
    %v265 = vadd.f32 %v264, %v250
    %v266 = vadd.f32 %v265, %v251
    %v267 = vadd.f32 %v266, %v252
    %v268 = vadd.f32 %v267, %v253
    %v269 = vadd.f32 %v268, %v254
    %v270 = vadd.f32 %v269, %v255
    %v271 = vadd.f32 %v270, %v256
    %v272 = vadd.f32 %v271, %v257
    %v273 = vadd.f32 %v272, %v258
    %v274 = vadd.f32 %v273, %v259
    %v275 = vadd.f32 %v274, %v260
    %v276 = vadd.f32 %v275, %v261
    %v277 = vadd.f32 %v276, %v262
    %278 = vadd.xlane.f32.xlu0 %v277
    %v279 = vpop.xlane.xlu0 %278
    %v280 = vrot.slane %v279, 4
    %v281 = vadd.f32 %v279, %v280
    %v282 = vrot.slane %v281, 2
    %v283 = vadd.f32 %v281, %v282
    %v284 = vrot.slane %v283, 1
    %v285 = vadd.f32 %v283, %v284
    %s286 = vtos %v285
    %v287 = vmul.f32 %v167, %v167
    %v288 = vmul.f32 %v168, %v168
    %v289 = vmul.f32 %v169, %v169
    %v290 = vmul.f32 %v170, %v170
    %v291 = vmul.f32 %v171, %v171
    %v292 = vmul.f32 %v172, %v172
    %v293 = vmul.f32 %v173, %v173
    %v294 = vmul.f32 %v174, %v174
    %vm295 = vcmask 1040384
    %v296 = vsel %vm295, %v287, 0.0
    %v297 = vsel %vm295, %v288, 0.0
    %v298 = vadd.f32 %v296, %v297
    %v299 = vsel %vm295, %v289, 0.0
    %v300 = vadd.f32 %v298, %v299
    %v301 = vsel %vm295, %v290, 0.0
    %v302 = vadd.f32 %v300, %v301
    %v303 = vsel %vm295, %v291, 0.0
    %v304 = vadd.f32 %v302, %v303
    %v305 = vsel %vm295, %v292, 0.0
    %v306 = vadd.f32 %v304, %v305
    %v307 = vsel %vm295, %v293, 0.0
    %v308 = vadd.f32 %v306, %v307
    %v309 = vsel %vm295, %v294, 0.0
    %v310 = vadd.f32 %v308, %v309
    %311 = vadd.xlane.f32.xlu0 %v310
    %v312 = vpop.xlane.xlu0 %311
    %v313 = vrot.slane %v312, 4
    %v314 = vadd.f32 %v312, %v313
    %v315 = vrot.slane %v314, 2
    %v316 = vadd.f32 %v314, %v315
    %v317 = vrot.slane %v316, 1
    %v318 = vadd.f32 %v316, %v317
    %s319 = vtos %v318
    %s320 = ssub.f32 %s286, %s319
    %v321 = vmul.f32 %v127, %v127
    %v322 = vmul.f32 %v128, %v128
    %v323 = vmul.f32 %v129, %v129
    %v324 = vmul.f32 %v130, %v130
    %v325 = vmul.f32 %v131, %v131
    %v326 = vmul.f32 %v132, %v132
    %v327 = vmul.f32 %v133, %v133
    %v328 = vmul.f32 %v134, %v134
    %v329 = vmul.f32 %v135, %v135
    %v330 = vmul.f32 %v136, %v136
    %v331 = vmul.f32 %v137, %v137
    %v332 = vmul.f32 %v138, %v138
    %v333 = vmul.f32 %v139, %v139
    %v334 = vmul.f32 %v140, %v140
    %v335 = vmul.f32 %v141, %v141
    %v336 = vmul.f32 %v142, %v142
    %v337 = vadd.f32 %v321, %v322
    %v338 = vadd.f32 %v337, %v323
    %v339 = vadd.f32 %v338, %v324
    %v340 = vadd.f32 %v339, %v325
    %v341 = vadd.f32 %v340, %v326
    %v342 = vadd.f32 %v341, %v327
    %v343 = vadd.f32 %v342, %v328
    %v344 = vadd.f32 %v343, %v329
    %v345 = vadd.f32 %v344, %v330
    %v346 = vadd.f32 %v345, %v331
    %v347 = vadd.f32 %v346, %v332
    %v348 = vadd.f32 %v347, %v333
    %v349 = vadd.f32 %v348, %v334
    %v350 = vadd.f32 %v349, %v335
    %v351 = vadd.f32 %v350, %v336
    %352 = vadd.xlane.f32.xlu0 %v351
    %v353 = vpop.xlane.xlu0 %352
    %v354 = vrot.slane %v353, 4
    %v355 = vadd.f32 %v353, %v354
    %v356 = vrot.slane %v355, 2
    %v357 = vadd.f32 %v355, %v356
    %v358 = vrot.slane %v357, 1
    %v359 = vadd.f32 %v357, %v358
    %s360 = vtos %v359
    %v361 = vmul.f32 %v231, %v231
    %v362 = vmul.f32 %v232, %v232
    %v363 = vmul.f32 %v233, %v233
    %v364 = vmul.f32 %v234, %v234
    %v365 = vmul.f32 %v235, %v235
    %v366 = vmul.f32 %v236, %v236
    %v367 = vmul.f32 %v237, %v237
    %v368 = vmul.f32 %v238, %v238
    %v369 = vmul.f32 %v239, %v239
    %v370 = vmul.f32 %v240, %v240
    %v371 = vmul.f32 %v241, %v241
    %v372 = vmul.f32 %v242, %v242
    %v373 = vmul.f32 %v243, %v243
    %v374 = vmul.f32 %v244, %v244
    %v375 = vmul.f32 %v245, %v245
    %v376 = vmul.f32 %v246, %v246
    %vm377 = vcmask 7168
    %v378 = vsel %vm377, %v361, 0.0
    %v379 = vsel %vm377, %v362, 0.0
    %v380 = vadd.f32 %v378, %v379
    %v381 = vsel %vm377, %v363, 0.0
    %v382 = vadd.f32 %v380, %v381
    %v383 = vsel %vm377, %v364, 0.0
    %v384 = vadd.f32 %v382, %v383
    %v385 = vsel %vm377, %v365, 0.0
    %v386 = vadd.f32 %v384, %v385
    %v387 = vsel %vm377, %v366, 0.0
    %v388 = vadd.f32 %v386, %v387
    %v389 = vsel %vm377, %v367, 0.0
    %v390 = vadd.f32 %v388, %v389
    %v391 = vsel %vm377, %v368, 0.0
    %v392 = vadd.f32 %v390, %v391
    %v393 = vsel %vm377, %v369, 0.0
    %v394 = vadd.f32 %v392, %v393
    %v395 = vsel %vm377, %v370, 0.0
    %v396 = vadd.f32 %v394, %v395
    %v397 = vsel %vm377, %v371, 0.0
    %v398 = vadd.f32 %v396, %v397
    %v399 = vsel %vm377, %v372, 0.0
    %v400 = vadd.f32 %v398, %v399
    %v401 = vsel %vm377, %v373, 0.0
    %v402 = vadd.f32 %v400, %v401
    %v403 = vsel %vm377, %v374, 0.0
    %v404 = vadd.f32 %v402, %v403
    %v405 = vsel %vm377, %v375, 0.0
    %v406 = vadd.f32 %v404, %v405
    %v407 = vsel %vm377, %v376, 0.0
    %v408 = vadd.f32 %v406, %v407
    %409 = vadd.xlane.f32.xlu0 %v408
    %v410 = vpop.xlane.xlu0 %409
    %v411 = vrot.slane %v410, 4
    %v412 = vadd.f32 %v410, %v411
    %v413 = vrot.slane %v412, 2
    %v414 = vadd.f32 %v412, %v413
    %v415 = vrot.slane %v414, 1
    %v416 = vadd.f32 %v414, %v415
    %s417 = vtos %v416
    %s418 = ssub.f32 %s360, %s417
    %v419 = vstv %s320
    %420 = vst [vmem:[#allocation5] sm:$0xff] %v419
    %v421 = vstv %s418
    %422 = vst [vmem:[#allocation6] sm:$0xff] %v421
    // Predicated region
    $region10: #{tpu_custom_call.1} parent=1 // pred_check
      _
    $region11: #{tpu_custom_call.1} parent=1 // pred_check_branch
      %424 = sbr.rel (0) target = $region13
    $region12: #{tpu_custom_call.1} parent=1 // pred_region
      %426 = vsyncadd [#allocation4], 0
      %s428 = sshll.u32 [#allocation5], 4
      %s429 = int_to_ptr.vmem [resolvable:$true] %s428
      %s430 = sshll.u32 %s1, 4
      %s431 = int_to_ptr.hbm [resolvable:$true] %s430
      %433 = dma.vmem_to_hbm [thread:$0]  %s429, 128, %s431, [#allocation4]
    $region13: #{tpu_custom_call.1} parent=1 // pred_fallthru
      _
    // Predicated region
    $region14: #{tpu_custom_call.1} parent=1 // pred_check
      _
    $region15: #{tpu_custom_call.1} parent=1 // pred_check_branch
      %435 = sbr.rel (0) target = $region17
    $region16: #{tpu_custom_call.1} parent=1 // pred_region
      %437 = vsyncadd [#allocation7], 0
      %s439 = sshll.u32 [#allocation6], 4
      %s440 = int_to_ptr.vmem [resolvable:$true] %s439
      %s441 = sshll.u32 %s2, 4
      %s442 = int_to_ptr.hbm [resolvable:$true] %s441
      %444 = dma.vmem_to_hbm [thread:$0]  %s440, 128, %s442, [#allocation7]
    $region17: #{tpu_custom_call.1} parent=1 // pred_fallthru
      _
    // Predicated region
    $region18: #{tpu_custom_call.1} parent=1 // pred_check
      _
    $region19: #{tpu_custom_call.1} parent=1 // pred_check_branch
      %446 = sbr.rel (0) target = $region21
    $region20: #{tpu_custom_call.1} parent=1 // pred_region
      %448 = dma.done [#allocation4], 128
    $region21: #{tpu_custom_call.1} parent=1 // pred_fallthru
      _
    // Predicated region
    $region22: #{tpu_custom_call.1} parent=1 // pred_check
      _
    $region23: #{tpu_custom_call.1} parent=1 // pred_check_branch
      %450 = sbr.rel (0) target = $region25
    $region24: #{tpu_custom_call.1} parent=1 // pred_region
      %452 = dma.done [#allocation7], 128
    $region25: #{tpu_custom_call.1} parent=1 // pred_fallthru
      _
    %453 = vsyncpa [#allocation3], 1
    %454 = vsyncpa [#allocation4], 1
    %455 = vsyncpa [#allocation7], 1

</llo_original>
